<compile_context>
chip_gen: v7x
topology: tpu7x:2x2x1
jax: 0.10.0
libtpu: 0.0.40
codegen_flags: <defaults>
</compile_context>

<pallas_src>
import functools
import math

import jax
import jax.numpy as jnp
from jax import lax
from jax.experimental import pallas as pl
from jax.experimental.pallas import tpu as pltpu


def _round_up(x, m):
    return ((x + m - 1) // m) * m


def _full_attention_kernel(q_ref, k_ref, v_ref, a_ref, o_ref, *,
                           scale, s_valid, s_total):
    # q_ref: (G, TL, E), k_ref: (G, S_pad, E), v_ref: (G, S_pad, D)
    # a_ref: (G, TL, S_pad), o_ref: (G, TL, D)      (leading batch dim squeezed)

    # Fold the softmax scale into q: G*TL*E multiplies instead of a G*TL*S pass.
    q = q_ref[...] * scale
    k = k_ref[...]
    v = v_ref[...]

    # scores[g,l,s] = sum_e q[g,l,e] * k[g,s,e] — contract the shared last dim on
    # the MXU (no explicit k transpose through the XLU), accumulate in f32.
    scores = lax.dot_general(
        q, k,
        dimension_numbers=(((2,), (2,)), ((0,), (0,))),
        preferred_element_type=jnp.float32,
    )                                                      # (G, TL, S_pad) f32

    if s_valid != s_total:
        # Mask the zero-padded key columns before the softmax.
        col = lax.broadcasted_iota(jnp.int32, scores.shape, 2)
        scores = jnp.where(col < s_valid, scores, -jnp.inf)

    # Numerically-stable softmax over the key axis.
    m = jnp.max(scores, axis=-1, keepdims=True)
    e = jnp.exp(scores - m)
    denom = jnp.sum(e, axis=-1, keepdims=True)
    inv = pl.reciprocal(denom, approx=False)   # exact: rows of A sum to ~1
    a = e * inv                                            # (G, TL, S_pad) f32

    # Cast once; reuse the cast for both the A store and the PV matmul when the
    # dtypes match (avoids two independent (G,TL,S) casts + an extra temporary).
    a_cast = a.astype(a_ref.dtype)
    a_ref[...] = a_cast
    if jnp.dtype(a_ref.dtype) == jnp.dtype(v_ref.dtype):
        pv_lhs = a_cast
    else:
        pv_lhs = a.astype(v_ref.dtype)

    # V[g,l,d] = sum_s A[g,l,s] * v[g,s,d]; keep V in its native dtype on the MXU,
    # accumulate in f32.
    out = lax.dot_general(
        pv_lhs, v,
        dimension_numbers=(((2,), (1,)), ((0,), (0,))),
        preferred_element_type=jnp.float32,
    )                                                      # (G, TL, D) f32
    o_ref[...] = out.astype(o_ref.dtype)


def _vmem_limit_bytes():
    try:
        cap = int(pltpu.get_tpu_info().vmem_capacity_bytes)
    except Exception:
        cap = 64 * 1024 * 1024                 # conservative (v7x physical VMEM)
    return min((cap * 3) // 4, 100 * 1024 * 1024)


def _choose_tiles(H, L, S_pad, E, D, in_bytes, a_bytes, o_bytes, budget):
    """Pick (G heads per step, TL query rows per step) that fit the VMEM budget."""
    l8 = _round_up(max(L, 1), 8)
    tl_cands = [t for t in (512, 256, 128, 64, 32, 16, 8) if t <= l8]
    tl_cap = min(512, l8)
    if not tl_cands or tl_cands[0] != tl_cap:
        tl_cands.insert(0, tl_cap)            # e.g. L8 = 48 -> include 48
    g_cands = [g for g in range(H, 0, -1) if H % g == 0]

    def working_set(g, tl):
        inputs = 2 * in_bytes * g * (tl * E + S_pad * (E + D))     # dbl-buffered
        outputs = 2 * g * tl * (S_pad * a_bytes + D * o_bytes)     # dbl-buffered
        temps = 4 * g * tl * S_pad * 4 + 4 * g * tl * D * 4        # f32 scratch
        return inputs + outputs + temps

    for tl in tl_cands:          # prefer the biggest query tile ...
        for g in g_cands:        # ... then the most heads per step
            if working_set(g, tl) <= budget:
                return g, tl
    return 1, 8


def full_attention(queries, keys, values, scale=None, a_dtype=None, out_dtype=None):
    """queries (B,L,H,E), keys (B,S,H,E), values (B,S,H,D)
       -> (V (B,L,H,D), A (B,H,L,S))."""
    B, L, H, E = queries.shape
    _, S, _, D = values.shape
    sc = float(scale) if scale is not None else 1.0 / math.sqrt(E)
    a_dtype = jnp.dtype(queries.dtype) if a_dtype is None else jnp.dtype(a_dtype)
    out_dtype = jnp.dtype(queries.dtype) if out_dtype is None else jnp.dtype(out_dtype)

    # Head-major layout so every per-head tile is a clean (sublane, lane) 2-D slab.
    q = jnp.transpose(queries, (0, 2, 1, 3))  # (B, H, L, E)
    k = jnp.transpose(keys,    (0, 2, 1, 3))  # (B, H, S, E)
    v = jnp.transpose(values,  (0, 2, 1, 3))  # (B, H, S, D)

    # Lane-dense A writeback: pad S to a multiple of 128 when the extra columns are
    # cheap (S > 128); padded key columns are masked to -inf inside the kernel.
    if S > 128 and S % 128 != 0:
        S_pad = _round_up(S, 128)
        k = jnp.pad(k, ((0, 0), (0, 0), (0, S_pad - S), (0, 0)))
        v = jnp.pad(v, ((0, 0), (0, 0), (0, S_pad - S), (0, 0)))
    else:
        S_pad = S

    vmem_limit = _vmem_limit_bytes()
    G, TL = _choose_tiles(
        H, L, S_pad, E, D,
        in_bytes=jnp.dtype(queries.dtype).itemsize,
        a_bytes=a_dtype.itemsize,
        o_bytes=out_dtype.itemsize,
        budget=(vmem_limit * 55) // 100,
    )

    L_pad = _round_up(L, TL)
    if L_pad != L:
        # Padded query rows are independent (row-wise softmax) and sliced off below.
        q = jnp.pad(q, ((0, 0), (0, 0), (0, L_pad - L), (0, 0)))
    num_lt = L_pad // TL

    kernel = functools.partial(_full_attention_kernel, scale=sc,
                               s_valid=S, s_total=S_pad)

    a_out, v_out = pl.pallas_call(
        kernel,
        out_shape=(
            jax.ShapeDtypeStruct((B, H, L_pad, S_pad), a_dtype),   # A (head-major)
            jax.ShapeDtypeStruct((B, H, L_pad, D), out_dtype),     # V (head-major)
        ),
        grid_spec=pltpu.PrefetchScalarGridSpec(
            num_scalar_prefetch=0,
            grid=(B, H // G, num_lt),
            in_specs=[
                # None = squeezed batch dim; kernel refs are 3-D (G, rows, cols).
                pl.BlockSpec((None, G, TL, E),    lambda b, hg, lt: (b, hg, lt, 0)),
                pl.BlockSpec((None, G, S_pad, E), lambda b, hg, lt: (b, hg, 0, 0)),
                pl.BlockSpec((None, G, S_pad, D), lambda b, hg, lt: (b, hg, 0, 0)),
            ],
            out_specs=[
                pl.BlockSpec((None, G, TL, S_pad), lambda b, hg, lt: (b, hg, lt, 0)),
                pl.BlockSpec((None, G, TL, D),     lambda b, hg, lt: (b, hg, lt, 0)),
            ],
        ),
        compiler_params=pltpu.CompilerParams(
            # lt is "arbitrary" so consecutive query tiles of one (b, head-group)
            # stay on the same core and the resident K/V blocks are not re-fetched.
            dimension_semantics=("parallel", "parallel", "arbitrary"),
            vmem_limit_bytes=vmem_limit,
        ),
    )(q, k, v)

    if L_pad != L or S_pad != S:
        a_out = a_out[:, :, :L, :S]
    if L_pad != L:
        v_out = v_out[:, :, :L, :]

    V = jnp.transpose(v_out, (0, 2, 1, 3))  # (B, L, H, D)
    return V, a_out


def _reference(queries, keys, values, scale=None):
    B, L, H, E = queries.shape
    sc = scale if scale is not None else 1.0 / math.sqrt(E)
    scores = jnp.einsum("blhe,bshe->bhls", queries, keys)
    A = jax.nn.softmax(sc * scores, axis=-1)
    V = jnp.einsum("bhls,bshd->blhd", A, values)
    return V, A


if __name__ == "__main__":
    B, L, S, H, E, D = 2, 16, 16, 4, 32, 32
    key = jax.random.PRNGKey(0)
    kq, kk, kv = jax.random.split(key, 3)
    queries = jax.random.normal(kq, (B, L, H, E), dtype=jnp.float32)
    keys = jax.random.normal(kk, (B, S, H, E), dtype=jnp.float32)
    values = jax.random.normal(kv, (B, S, H, D), dtype=jnp.float32)

    V, A = full_attention(queries, keys, values)
    V = jax.block_until_ready(V)
    A = jax.block_until_ready(A)

    V_ref, A_ref = _reference(queries, keys, values)
    assert V.shape == (B, L, H, D) and A.shape == (B, H, L, S)
    assert jnp.allclose(V, V_ref, atol=2e-3, rtol=2e-3)
    assert jnp.allclose(A, A_ref, atol=2e-3, rtol=2e-3)

    print("KERNEL_OK")
</pallas_src>

<mosaic_0001>
module attributes {stable_mosaic.version = 11 : i64} {
  func.func @_full_attention_kernel(%arg0: i32, %arg1: i32, %arg2: i32, %arg3: memref<1x4x16x32xf32, #tpu.memory_space<vmem>>, %arg4: memref<1x4x16x32xf32, #tpu.memory_space<vmem>>, %arg5: memref<1x4x16x32xf32, #tpu.memory_space<vmem>>, %arg6: memref<1x4x16x16xf32, #tpu.memory_space<vmem>>, %arg7: memref<1x4x16x32xf32, #tpu.memory_space<vmem>>) attributes {dimension_semantics = [#tpu.dimension_semantics<parallel>, #tpu.dimension_semantics<parallel>, #tpu.dimension_semantics<arbitrary>], iteration_bounds = array<i64: 2, 1, 1>, scalar_prefetch = 0 : i64, scratch_operands = 0 : i64, tpu.core_type = #tpu.core_type<tc>, window_params = [{transform_indices = @transform_0, window_bounds = array<i64: 1, 4, 16, 32>}, {transform_indices = @transform_1, window_bounds = array<i64: 1, 4, 16, 32>}, {transform_indices = @transform_2, window_bounds = array<i64: 1, 4, 16, 32>}, {transform_indices = @transform_3, window_bounds = array<i64: 1, 4, 16, 16>}, {transform_indices = @transform_4, window_bounds = array<i64: 1, 4, 16, 32>}]} {
    %c0 = arith.constant 0 : index
    %c0_0 = arith.constant 0 : index
    %c0_1 = arith.constant 0 : index
    %c0_2 = arith.constant 0 : index
    %0 = vector.load %arg3[%c0, %c0_0, %c0_1, %c0_2] : memref<1x4x16x32xf32, #tpu.memory_space<vmem>>, vector<1x4x16x32xf32>
    %1 = vector.shape_cast %0 : vector<1x4x16x32xf32> to vector<4x16x32xf32>
    %cst = arith.constant 0.176776692 : f32
    %2 = vector.broadcast %cst : f32 to vector<4x16x32xf32>
    %3 = arith.mulf %1, %2 : vector<4x16x32xf32>
    %c0_3 = arith.constant 0 : index
    %c0_4 = arith.constant 0 : index
    %c0_5 = arith.constant 0 : index
    %c0_6 = arith.constant 0 : index
    %4 = vector.load %arg4[%c0_3, %c0_4, %c0_5, %c0_6] : memref<1x4x16x32xf32, #tpu.memory_space<vmem>>, vector<1x4x16x32xf32>
    %5 = vector.shape_cast %4 : vector<1x4x16x32xf32> to vector<4x16x32xf32>
    %c0_7 = arith.constant 0 : index
    %c0_8 = arith.constant 0 : index
    %c0_9 = arith.constant 0 : index
    %c0_10 = arith.constant 0 : index
    %6 = vector.load %arg5[%c0_7, %c0_8, %c0_9, %c0_10] : memref<1x4x16x32xf32, #tpu.memory_space<vmem>>, vector<1x4x16x32xf32>
    %7 = vector.shape_cast %6 : vector<1x4x16x32xf32> to vector<4x16x32xf32>
    %cst_11 = arith.constant dense<0.000000e+00> : vector<4x16x16xf32>
    %8 = tpu.matmul %3, %5, %cst_11 {dimension_numbers = #tpu.dot_dimension_numbers<[2], [2], [1], [1], [0, 0, 0, 1, 1, 1], [0], [0]>} : vector<4x16x32xf32>, vector<4x16x32xf32>, vector<4x16x16xf32> -> vector<4x16x16xf32>
    %cst_12 = arith.constant dense<0xFF800000> : vector<4x16xf32>
    %9 = vector.multi_reduction <maximumf>, %8, %cst_12 [2] : vector<4x16x16xf32> to vector<4x16xf32>
    %10 = vector.shape_cast %9 : vector<4x16xf32> to vector<4x16x1xf32>
    %11 = vector.broadcast %10 : vector<4x16x1xf32> to vector<4x16x16xf32>
    %12 = arith.subf %8, %11 : vector<4x16x16xf32>
    %13 = math.exp %12 : vector<4x16x16xf32>
    %cst_13 = arith.constant dense<0.000000e+00> : vector<4x16xf32>
    %14 = vector.multi_reduction <add>, %13, %cst_13 [2] : vector<4x16x16xf32> to vector<4x16xf32>
    %15 = vector.shape_cast %14 : vector<4x16xf32> to vector<4x16x1xf32>
    %16 = tpu.reciprocal %15 : vector<4x16x1xf32> -> vector<4x16x1xf32>
    %17 = vector.broadcast %16 : vector<4x16x1xf32> to vector<4x16x16xf32>
    %18 = arith.mulf %13, %17 : vector<4x16x16xf32>
    %c0_14 = arith.constant 0 : index
    %c0_15 = arith.constant 0 : index
    %c0_16 = arith.constant 0 : index
    %c0_17 = arith.constant 0 : index
    %19 = vector.load %arg6[%c0_14, %c0_15, %c0_16, %c0_17] : memref<1x4x16x16xf32, #tpu.memory_space<vmem>>, vector<1x4x16x16xf32>
    %20 = vector.shape_cast %19 : vector<1x4x16x16xf32> to vector<4x16x16xf32>
    %21 = vector.shape_cast %18 : vector<4x16x16xf32> to vector<1x4x16x16xf32>
    tpu.vector_store %arg6[%c0_14, %c0_15, %c0_16, %c0_17], %21 {strides = array<i32>} : memref<1x4x16x16xf32, #tpu.memory_space<vmem>>, vector<1x4x16x16xf32>,
    %cst_18 = arith.constant dense<0.000000e+00> : vector<4x16x32xf32>
    %22 = tpu.matmul %18, %7, %cst_18 {dimension_numbers = #tpu.dot_dimension_numbers<[2], [1], [1], [2], [0, 0, 0, 1, 1, 2], [0], [0]>} : vector<4x16x16xf32>, vector<4x16x32xf32>, vector<4x16x32xf32> -> vector<4x16x32xf32>
    %c0_19 = arith.constant 0 : index
    %c0_20 = arith.constant 0 : index
    %c0_21 = arith.constant 0 : index
    %c0_22 = arith.constant 0 : index
    %23 = vector.load %arg7[%c0_19, %c0_20, %c0_21, %c0_22] : memref<1x4x16x32xf32, #tpu.memory_space<vmem>>, vector<1x4x16x32xf32>
    %24 = vector.shape_cast %23 : vector<1x4x16x32xf32> to vector<4x16x32xf32>
    %25 = vector.shape_cast %22 : vector<4x16x32xf32> to vector<1x4x16x32xf32>
    tpu.vector_store %arg7[%c0_19, %c0_20, %c0_21, %c0_22], %25 {strides = array<i32>} : memref<1x4x16x32xf32, #tpu.memory_space<vmem>>, vector<1x4x16x32xf32>,
    return
  }
  func.func @transform_0(%arg0: i32, %arg1: i32, %arg2: i32) -> (i32, i32, i32, i32) {
    %c0_i32 = arith.constant 0 : i32
    %c0_i32_0 = arith.constant 0 : i32
    return %arg0, %arg1, %arg2, %c0_i32 : i32, i32, i32, i32
  }
  func.func @transform_1(%arg0: i32, %arg1: i32, %arg2: i32) -> (i32, i32, i32, i32) {
    %c0_i32 = arith.constant 0 : i32
    %c0_i32_0 = arith.constant 0 : i32
    %c0_i32_1 = arith.constant 0 : i32
    return %arg0, %arg1, %c0_i32, %c0_i32_0 : i32, i32, i32, i32
  }
  func.func @transform_2(%arg0: i32, %arg1: i32, %arg2: i32) -> (i32, i32, i32, i32) {
    %c0_i32 = arith.constant 0 : i32
    %c0_i32_0 = arith.constant 0 : i32
    %c0_i32_1 = arith.constant 0 : i32
    return %arg0, %arg1, %c0_i32, %c0_i32_0 : i32, i32, i32, i32
  }
  func.func @transform_3(%arg0: i32, %arg1: i32, %arg2: i32) -> (i32, i32, i32, i32) {
    %c0_i32 = arith.constant 0 : i32
    %c0_i32_0 = arith.constant 0 : i32
    return %arg0, %arg1, %arg2, %c0_i32 : i32, i32, i32, i32
  }
  func.func @transform_4(%arg0: i32, %arg1: i32, %arg2: i32) -> (i32, i32, i32, i32) {
    %c0_i32 = arith.constant 0 : i32
    %c0_i32_0 = arith.constant 0 : i32
    return %arg0, %arg1, %arg2, %c0_i32 : i32, i32, i32, i32
  }
}

</mosaic_0001>

<llo_original>
// kernel: tpu_custom_call.1
$region0: #{tpu_custom_call.1}
  #allocation0 [shape = 'u32[]', space=smem, size = 0x4, offset = 0x4, fixed_abs, tag = 'smem constant byte address 0x4 - core index']
  #allocation1 [shape = 'u32[144,128]{1,0:T(1,128)}', space=vmem, size = 0x12000, scoped, tag = 'internal scratch']
  %s0 = inlined_call_operand.hbm [shape: f32[2,4,16,32], index: 0, kind: input, shape index: {}]
  %s1 = inlined_call_operand.hbm [shape: f32[2,4,16,32], index: 1, kind: input, shape index: {}]
  %s2 = inlined_call_operand.hbm [shape: f32[2,4,16,32], index: 2, kind: input, shape index: {}]
  %s3 = inlined_call_operand.hbm [shape: f32[2,4,16,16], index: 3, kind: output, shape index: {0}]
  %s4 = inlined_call_operand.hbm [shape: f32[2,4,16,32], index: 4, kind: output, shape index: {1}]
  %5 = xla_tuple %s3, %s4
  %s6 = sld [smem:[#allocation0]]
  $region65: #{tpu_custom_call.1} parent=0
    _
  %s8 = ssub.s32 1, %s6
  %s9 = scalar_select 0, %s8, %s6
  $region1: #{tpu_custom_call.1} parent=0
    #allocation2 [shape = 'u8[65536]{0}', space=vmem, size = 0x10000, scoped, tag = 'input window, operand 0']
    #allocation3 [shape = 's32[2]{0}', space=sflag, size = 0x8, scoped, tag = 'scoped memory for tpu_custom_call.1']
    #allocation4 [shape = 's32[2]{0}', space=sflag, size = 0x8, scoped, tag = 'scoped memory for tpu_custom_call.1']
    #allocation5 [shape = 'u8[65536]{0}', space=vmem, size = 0x10000, scoped, tag = 'input window, operand 1']
    #allocation6 [shape = 's32[2]{0}', space=sflag, size = 0x8, scoped, tag = 'scoped memory for tpu_custom_call.1']
    #allocation7 [shape = 'u8[65536]{0}', space=vmem, size = 0x10000, scoped, tag = 'input window, operand 2']
    #allocation8 [shape = 'u8[65536]{0}', space=vmem, size = 0x10000, scoped, tag = 'output window, operand 0']
    #allocation9 [shape = 'u8[65536]{0}', space=vmem, size = 0x10000, scoped, tag = 'output window, operand 1']
    #allocation10 [shape = 's32[2]{0}', space=sflag, size = 0x8, scoped, tag = 'scoped memory for tpu_custom_call.1']
    %10 = vsyncpa [#allocation3], 0
    %s11 = scalar_lea.sflag [#allocation3], 1
    %12 = vsyncpa %s11, 0
    %13 = vsyncpa [#allocation6], 0
    %s14 = scalar_lea.sflag [#allocation6], 1
    %15 = vsyncpa %s14, 0
    %16 = vsyncpa [#allocation4], 0
    %s17 = scalar_lea.sflag [#allocation4], 1
    %18 = vsyncpa %s17, 0
    %19 = vsyncpa [#allocation10], 0
    %s20 = scalar_lea.sflag [#allocation10], 1
    %21 = vsyncpa %s20, 0
    loop: start=0, step=1, limit=4
    $region2: #{tpu_custom_call.1} parent=1 // loop_pre_header
      _
    $region3: #{tpu_custom_call.1} parent=1 // loop_header
      %s23 = sphi 0, %s27
      %p24 = scmp.ge.s32.totalorder %s23, 4
      %s30 = sphi 0, %s49
      %s31 = sphi 0, %s45
      %s32 = sphi 0, %s41
      %s33 = sphi 0, %s30
      %s34 = sphi 0, %s31
      %s35 = sphi 0, %s32
      %s36 = sphi 0, %s33
      %s37 = sphi 0, %s34
      %s38 = sphi 0, %s35
      %s56 = sphi 0, %s58
      %s59 = sphi 0, %s56
      %s60 = sphi 0, %s59
      %s76 = sphi 0, %s60
      %s84 = sphi 0, %s86
      %s87 = sphi 0, %s84
      %s88 = sphi 0, %s87
      %s104 = sphi 0, %s88
      %s112 = sphi 0, %s114
      %s115 = sphi 0, %s112
      %s116 = sphi 0, %s115
      %s132 = sphi 0, %s116
      %s142 = sphi 0, %s144
      %s145 = sphi 0, %s142
      %s146 = sphi 0, %s145
      %s162 = sphi 0, %s146
      %s172 = sphi 0, %s174
      %s175 = sphi 0, %s172
      %s176 = sphi 0, %s175
      %s192 = sphi 0, %s176
    $region4: #{tpu_custom_call.1} parent=1 // loop_header_branch
      %26 = sbr.rel (%p24) target = $region8
    $region5: #{tpu_custom_call.1} parent=1 // loop_body
      %s28 = ssub.s32 %s23, 1
      %s29 = ssub.s32 %s23, 2
      %s39 = sadd.s32 1, %s32
      %p40 = scmp.ge.s32.totalorder %s39, 1
      %s41 = scalar_select %p40, 0, %s39
      %s42 = sadd.s32 1, %s31
      %s43 = scalar_select %p40, %s42, %s31
      %p44 = scmp.ge.s32.totalorder %s43, 1
      %s45 = scalar_select %p44, 0, %s43
      %s46 = sadd.s32 1, %s30
      %s47 = scalar_select %p44, %s46, %s30
      %p48 = scmp.ge.s32.totalorder %s47, 2
      %s49 = scalar_select %p48, 0, %s47
      %s50 = ssub.s32 %s30, %s49
      %s51 = ssub.s32 %s31, %s45
      %s52 = sor.u32 %s50, %s51
      %s53 = ssub.s32 %s32, %s41
      %s54 = sor.u32 %s52, %s53
      %p55 = scmp.eq.s32.totalorder %s54, 0
      %s57 = sadd.s32 %s56, 1
      %s58 = scalar_select %p55, %s56, %s57
      %p61 = pneg %p55
      %p62 = scmp.eq.s32.totalorder %s23, 1
      %p63 = por %p61, %p62
      %p64 = scmp.ne.s32.totalorder %s56, %s59
      %p65 = scmp.eq.s32.totalorder %s23, 0
      %p66 = por %p64, %p65
      %p67 = scmp.ne.s32.totalorder %s56, %s59
      %p68 = scmp.eq.s32.totalorder %s28, 1
      %p69 = por %p67, %p68
      %p70 = scmp.ne.s32.totalorder %s59, %s60
      %p71 = scmp.eq.s32.totalorder %s28, 0
      %p72 = por %p70, %p71
      %p73 = scmp.ne.s32.totalorder %s59, %s60
      %p74 = scmp.eq.s32.totalorder %s29, 1
      %p75 = por %p73, %p74
      %p77 = scmp.ne.s32.totalorder %s60, %s76
      %p78 = scmp.eq.s32.totalorder %s29, 0
      %p79 = por %p77, %p78
      %s80 = ssub.s32 %s30, %s49
      %s81 = ssub.s32 %s31, %s45
      %s82 = sor.u32 %s80, %s81
      %p83 = scmp.eq.s32.totalorder %s82, 0
      %s85 = sadd.s32 %s84, 1
      %s86 = scalar_select %p83, %s84, %s85
      %p89 = pneg %p83
      %p90 = scmp.eq.s32.totalorder %s23, 1
      %p91 = por %p89, %p90
      %p92 = scmp.ne.s32.totalorder %s84, %s87
      %p93 = scmp.eq.s32.totalorder %s23, 0
      %p94 = por %p92, %p93
      %p95 = scmp.ne.s32.totalorder %s84, %s87
      %p96 = scmp.eq.s32.totalorder %s28, 1
      %p97 = por %p95, %p96
      %p98 = scmp.ne.s32.totalorder %s87, %s88
      %p99 = scmp.eq.s32.totalorder %s28, 0
      %p100 = por %p98, %p99
      %p101 = scmp.ne.s32.totalorder %s87, %s88
      %p102 = scmp.eq.s32.totalorder %s29, 1
      %p103 = por %p101, %p102
      %p105 = scmp.ne.s32.totalorder %s88, %s104
      %p106 = scmp.eq.s32.totalorder %s29, 0
      %p107 = por %p105, %p106
      %s108 = ssub.s32 %s30, %s49
      %s109 = ssub.s32 %s31, %s45
      %s110 = sor.u32 %s108, %s109
      %p111 = scmp.eq.s32.totalorder %s110, 0
      %s113 = sadd.s32 %s112, 1
      %s114 = scalar_select %p111, %s112, %s113
      %p117 = pneg %p111
      %p118 = scmp.eq.s32.totalorder %s23, 1
      %p119 = por %p117, %p118
      %p120 = scmp.ne.s32.totalorder %s112, %s115
      %p121 = scmp.eq.s32.totalorder %s23, 0
      %p122 = por %p120, %p121
      %p123 = scmp.ne.s32.totalorder %s112, %s115
      %p124 = scmp.eq.s32.totalorder %s28, 1
      %p125 = por %p123, %p124
      %p126 = scmp.ne.s32.totalorder %s115, %s116
      %p127 = scmp.eq.s32.totalorder %s28, 0
      %p128 = por %p126, %p127
      %p129 = scmp.ne.s32.totalorder %s115, %s116
      %p130 = scmp.eq.s32.totalorder %s29, 1
      %p131 = por %p129, %p130
      %p133 = scmp.ne.s32.totalorder %s116, %s132
      %p134 = scmp.eq.s32.totalorder %s29, 0
      %p135 = por %p133, %p134
      %s136 = ssub.s32 %s30, %s49
      %s137 = ssub.s32 %s31, %s45
      %s138 = sor.u32 %s136, %s137
      %s139 = ssub.s32 %s32, %s41
      %s140 = sor.u32 %s138, %s139
      %p141 = scmp.eq.s32.totalorder %s140, 0
      %s143 = sadd.s32 %s142, 1
      %s144 = scalar_select %p141, %s142, %s143
      %p147 = pneg %p141
      %p148 = scmp.eq.s32.totalorder %s23, 1
      %p149 = por %p147, %p148
      %p150 = scmp.ne.s32.totalorder %s142, %s145
      %p151 = scmp.eq.s32.totalorder %s23, 0
      %p152 = por %p150, %p151
      %p153 = scmp.ne.s32.totalorder %s142, %s145
      %p154 = scmp.eq.s32.totalorder %s28, 1
      %p155 = por %p153, %p154
      %p156 = scmp.ne.s32.totalorder %s145, %s146
      %p157 = scmp.eq.s32.totalorder %s28, 0
      %p158 = por %p156, %p157
      %p159 = scmp.ne.s32.totalorder %s145, %s146
      %p160 = scmp.eq.s32.totalorder %s29, 1
      %p161 = por %p159, %p160
      %p163 = scmp.ne.s32.totalorder %s146, %s162
      %p164 = scmp.eq.s32.totalorder %s29, 0
      %p165 = por %p163, %p164
      %s166 = ssub.s32 %s30, %s49
      %s167 = ssub.s32 %s31, %s45
      %s168 = sor.u32 %s166, %s167
      %s169 = ssub.s32 %s32, %s41
      %s170 = sor.u32 %s168, %s169
      %p171 = scmp.eq.s32.totalorder %s170, 0
      %s173 = sadd.s32 %s172, 1
      %s174 = scalar_select %p171, %s172, %s173
      %p177 = pneg %p171
      %p178 = scmp.eq.s32.totalorder %s23, 1
      %p179 = por %p177, %p178
      %p180 = scmp.ne.s32.totalorder %s172, %s175
      %p181 = scmp.eq.s32.totalorder %s23, 0
      %p182 = por %p180, %p181
      %p183 = scmp.ne.s32.totalorder %s172, %s175
      %p184 = scmp.eq.s32.totalorder %s28, 1
      %p185 = por %p183, %p184
      %p186 = scmp.ne.s32.totalorder %s175, %s176
      %p187 = scmp.eq.s32.totalorder %s28, 0
      %p188 = por %p186, %p187
      %p189 = scmp.ne.s32.totalorder %s175, %s176
      %p190 = scmp.eq.s32.totalorder %s29, 1
      %p191 = por %p189, %p190
      %p193 = scmp.ne.s32.totalorder %s176, %s192
      %p194 = scmp.eq.s32.totalorder %s29, 0
      %p195 = por %p193, %p194
      %p196 = scmp.le.s32.totalorder 1, %s23
      %p197 = scmp.lt.s32.totalorder %s23, 3
      %p198 = pnand %p196, %p197
      %p199 = pneg %p198
      // Predicated region
      $region9: #{tpu_custom_call.1} parent=5 // pred_check
        _
      $region10: #{tpu_custom_call.1} parent=5 // pred_check_branch
        %201 = sbr.rel (%p198) target = $region12
      $region11: #{tpu_custom_call.1} parent=5 // pred_region
        %s202 = ssub.s32 %s23, 1
      $region12: #{tpu_custom_call.1} parent=5 // pred_fallthru
        _
      %p203 = scmp.lt.s32.totalorder %s23, 2
      // Predicated region
      $region13: #{tpu_custom_call.1} parent=5 // pred_check
        %p204 = pneg %p203
      $region14: #{tpu_custom_call.1} parent=5 // pred_check_branch
        %206 = sbr.rel (%p204) target = $region16
      $region15: #{tpu_custom_call.1} parent=5 // pred_region
        // Predicated region
        $region17: #{tpu_custom_call.1} parent=15 // pred_check
          %p207 = pneg %p66
        $region18: #{tpu_custom_call.1} parent=15 // pred_check_branch
          %209 = sbr.rel (%p207) target = $region20
        $region19: #{tpu_custom_call.1} parent=15 // pred_region
          %s210 = sand.u32 %s56, 1
          %s211 = scalar_lea.sflag [#allocation3], %s210
          %s212 = sand.u32 %s56, 1
          %s213 = smul.addr %s212, 64
          %s214 = scalar_lea.vmem [#allocation2], %s213
          %s215 = smul.u32 4, %s31
          %s216 = smul.u32 2, %s32
          %s218 = ssub.s32 1024, 1024
          %219 = vsyncadd %s211, %s218
          %s220 = smul.addr %s215, 2
          %s221 = sadd.s32 %s216, %s220
          %s222 = smul.addr %s30, 8
          %s223 = sadd.s32 %s221, %s222
          %s224 = smul.addr %s223, 128
          %s225 = scalar_lea.hbm %s0, %s224
          %s226 = sshll.u32 %s214, 4
          %s227 = int_to_ptr.vmem [resolvable:$true] %s226
          %232 = dma.hbm_to_vmem [thread:$0]  %s225, 1024, %s227, %s211, 128, 128, 8
        $region20: #{tpu_custom_call.1} parent=15 // pred_fallthru
          _
        // Predicated region
        $region21: #{tpu_custom_call.1} parent=15 // pred_check
          %p233 = pneg %p94
        $region22: #{tpu_custom_call.1} parent=15 // pred_check_branch
          %235 = sbr.rel (%p233) target = $region24
        $region23: #{tpu_custom_call.1} parent=15 // pred_region
          %s236 = sand.u32 %s23, 1
          %s237 = scalar_lea.sflag [#allocation6], %s236
          %s238 = sand.u32 %s84, 1
          %s239 = smul.addr %s238, 64
          %s240 = scalar_lea.vmem [#allocation5], %s239
          %s241 = smul.u32 4, %s31
          %s243 = ssub.s32 1024, 1024
          %244 = vsyncadd %s237, %s243
          %s245 = smul.addr %s241, 2
          %s246 = smul.addr %s30, 8
          %s247 = sadd.s32 %s245, %s246
          %s248 = smul.addr %s247, 128
          %s249 = scalar_lea.hbm %s1, %s248
          %s250 = sshll.u32 %s240, 4
          %s251 = int_to_ptr.vmem [resolvable:$true] %s250
          %256 = dma.hbm_to_vmem [thread:$0]  %s249, 1024, %s251, %s237, 128, 128, 8
        $region24: #{tpu_custom_call.1} parent=15 // pred_fallthru
          _
        // Predicated region
        $region25: #{tpu_custom_call.1} parent=15 // pred_check
          %p257 = pneg %p122
        $region26: #{tpu_custom_call.1} parent=15 // pred_check_branch
          %259 = sbr.rel (%p257) target = $region28
        $region27: #{tpu_custom_call.1} parent=15 // pred_region
          %s260 = sand.u32 %s23, 1
          %s261 = scalar_lea.sflag [#allocation6], %s260
          %s262 = sand.u32 %s112, 1
          %s263 = smul.addr %s262, 64
          %s264 = scalar_lea.vmem [#allocation7], %s263
          %s265 = smul.u32 4, %s31
          %s267 = ssub.s32 1024, 1024
          %268 = vsyncadd %s261, %s267
          %s269 = smul.addr %s265, 2
          %s270 = smul.addr %s30, 8
          %s271 = sadd.s32 %s269, %s270
          %s272 = smul.addr %s271, 128
          %s273 = scalar_lea.hbm %s2, %s272
          %s274 = sshll.u32 %s264, 4
          %s275 = int_to_ptr.vmem [resolvable:$true] %s274
          %280 = dma.hbm_to_vmem [thread:$0]  %s273, 1024, %s275, %s261, 128, 128, 8
        $region28: #{tpu_custom_call.1} parent=15 // pred_fallthru
          _
      $region16: #{tpu_custom_call.1} parent=5 // pred_fallthru
        _
      %p281 = scmp.le.s32.totalorder 1, %s23
      %p282 = scmp.lt.s32.totalorder %s23, 3
      %p283 = pnand %p281, %p282
      %p284 = pneg %p283
      // Predicated region
      $region29: #{tpu_custom_call.1} parent=5 // pred_check
        _
      $region30: #{tpu_custom_call.1} parent=5 // pred_check_branch
        %286 = sbr.rel (%p283) target = $region32
      $region31: #{tpu_custom_call.1} parent=5 // pred_region
        %s287 = ssub.s32 %s23, 1
        %s288 = sand.u32 %s59, 1
        %s289 = scalar_lea.sflag [#allocation3], %s288
        %s290 = sand.u32 %s59, 1
        %s291 = smul.addr %s290, 64
        %s292 = scalar_lea.vmem [#allocation2], %s291
        // Predicated region
        $region33: #{tpu_custom_call.1} parent=31 // pred_check
          %p293 = pneg %p72
        $region34: #{tpu_custom_call.1} parent=31 // pred_check_branch
          %295 = sbr.rel (%p293) target = $region36
        $region35: #{tpu_custom_call.1} parent=31 // pred_region
          %296 = dma.done %s289, 1024
        $region36: #{tpu_custom_call.1} parent=31 // pred_fallthru
          _
        %s297 = sand.u32 %s28, 1
        %s298 = scalar_lea.sflag [#allocation6], %s297
        %s299 = sand.u32 %s87, 1
        %s300 = smul.addr %s299, 64
        %s301 = scalar_lea.vmem [#allocation5], %s300
        // Predicated region
        $region37: #{tpu_custom_call.1} parent=31 // pred_check
          %p302 = pneg %p100
        $region38: #{tpu_custom_call.1} parent=31 // pred_check_branch
          %304 = sbr.rel (%p302) target = $region40
        $region39: #{tpu_custom_call.1} parent=31 // pred_region
          %305 = dma.done %s298, 1024
        $region40: #{tpu_custom_call.1} parent=31 // pred_fallthru
          _
        %s306 = sand.u32 %s28, 1
        %s307 = scalar_lea.sflag [#allocation6], %s306
        %s308 = sand.u32 %s115, 1
        %s309 = smul.addr %s308, 64
        %s310 = scalar_lea.vmem [#allocation7], %s309
        // Predicated region
        $region41: #{tpu_custom_call.1} parent=31 // pred_check
          %p311 = pneg %p128
        $region42: #{tpu_custom_call.1} parent=31 // pred_check_branch
          %313 = sbr.rel (%p311) target = $region44
        $region43: #{tpu_custom_call.1} parent=31 // pred_region
          %314 = dma.done %s307, 1024
        $region44: #{tpu_custom_call.1} parent=31 // pred_fallthru
          _
        %s315 = sand.u32 %s59, 1
        %s316 = scalar_lea.sflag [#allocation3], %s315
        %s317 = sand.u32 %s59, 1
        %s318 = smul.addr %s317, 64
        %s319 = scalar_lea.vmem [#allocation2], %s318
        %p320 = pneg %p72
        %p321 = pneg %p69
        %s322 = sand.u32 %s28, 1
        %s323 = scalar_lea.sflag [#allocation6], %s322
        %s324 = sand.u32 %s87, 1
        %s325 = smul.addr %s324, 64
        %s326 = scalar_lea.vmem [#allocation5], %s325
        %p327 = pneg %p100
        %p328 = pneg %p97
        %s329 = sand.u32 %s28, 1
        %s330 = scalar_lea.sflag [#allocation6], %s329
        %s331 = sand.u32 %s115, 1
        %s332 = smul.addr %s331, 64
        %s333 = scalar_lea.vmem [#allocation7], %s332
        %p334 = pneg %p128
        %p335 = pneg %p125
        %p336 = pneg %p158
        %p337 = pneg %p155
        %s338 = sand.u32 %s145, 1
        %s339 = scalar_lea.sflag [#allocation4], %s338
        %s340 = sand.u32 %s145, 1
        %s341 = smul.addr %s340, 64
        %s342 = scalar_lea.vmem [#allocation8], %s341
        %p343 = pneg %p188
        %p344 = pneg %p185
        %s345 = sand.u32 %s175, 1
        %s346 = scalar_lea.sflag [#allocation10], %s345
        %s347 = sand.u32 %s175, 1
        %s348 = smul.addr %s347, 64
        %s349 = scalar_lea.vmem [#allocation9], %s348
        %s350 = smul.u32 4, %s34
        %s351 = smul.u32 2, %s35
        %s352 = smul.u32 4, %s34
        %s353 = smul.u32 4, %s34
        %s354 = smul.u32 4, %s34
        %s355 = smul.u32 2, %s35
        %s356 = smul.u32 4, %s34
        %s357 = smul.u32 2, %s35
        %v358 = vld [vmem:[%s292] sm:$0xff]
        %v359 = vld [vmem:[%s292 + $0x8] sm:$0xff]
        %v360 = vld [vmem:[%s292 + $0x10] sm:$0xff]
        %v361 = vld [vmem:[%s292 + $0x18] sm:$0xff]
        %v362 = vld [vmem:[%s292 + $0x20] sm:$0xff]
        %v363 = vld [vmem:[%s292 + $0x28] sm:$0xff]
        %v364 = vld [vmem:[%s292 + $0x30] sm:$0xff]
        %v365 = vld [vmem:[%s292 + $0x38] sm:$0xff]
        %v366 = vmul.f32 %v358, 0.17677669
        %v367 = vmul.f32 %v359, 0.17677669
        %v368 = vmul.f32 %v360, 0.17677669
        %v369 = vmul.f32 %v361, 0.17677669
        %v370 = vmul.f32 %v362, 0.17677669
        %v371 = vmul.f32 %v363, 0.17677669
        %v372 = vmul.f32 %v364, 0.17677669
        %v373 = vmul.f32 %v365, 0.17677669
        %v374 = vld [vmem:[%s301] sm:$0xff]
        %v375 = vld [vmem:[%s301 + $0x8] sm:$0xff]
        %v376 = vld [vmem:[%s301 + $0x10] sm:$0xff]
        %v377 = vld [vmem:[%s301 + $0x18] sm:$0xff]
        %v378 = vld [vmem:[%s301 + $0x20] sm:$0xff]
        %v379 = vld [vmem:[%s301 + $0x28] sm:$0xff]
        %v380 = vld [vmem:[%s301 + $0x30] sm:$0xff]
        %v381 = vld [vmem:[%s301 + $0x38] sm:$0xff]
        %v382 = vld [vmem:[%s310] sm:$0xff]
        %v383 = vld [vmem:[%s310 + $0x8] sm:$0xff]
        %v384 = vld [vmem:[%s310 + $0x10] sm:$0xff]
        %v385 = vld [vmem:[%s310 + $0x18] sm:$0xff]
        %v386 = vld [vmem:[%s310 + $0x20] sm:$0xff]
        %v387 = vld [vmem:[%s310 + $0x28] sm:$0xff]
        %v388 = vld [vmem:[%s310 + $0x30] sm:$0xff]
        %v389 = vld [vmem:[%s310 + $0x38] sm:$0xff]
        %vm390 = vcmask 261120
        %v392 = vsel %vm390, %v366, 0
        %v395 = vsel %vm390, %v367, 0
        %v398 = vsel %vm390, %v374, 0
        %v401 = vsel %vm390, %v375, 0
        %403 = vmatprep.subr.mxu0 0.0
        %404 = vmatpush1.xpose.msra.mxu0 %v398
        %405 = vmatprep.subr.mxu0 0.0
        %406 = vmatpush1.xpose.msra.mxu0 %v401
        %407 = vmatprep.subr.mxu0 0.0
        %408 = vmatpush1.xpose.msra.mxu0 0.0
        %409 = vmatprep.subr.mxu0 0.0
        %410 = vmatpush1.xpose.msra.mxu0 0.0
        %411 = vmatprep.subr.mxu0 0.0
        %412 = vmatpush1.xpose.msra.mxu0 0.0
        %413 = vmatprep.subr.mxu0 0.0
        %414 = vmatpush1.xpose.msra.mxu0 0.0
        %415 = vmatprep.subr.mxu0 0.0
        %416 = vmatpush1.xpose.msra.mxu0 0.0
        %417 = vmatprep.subr.mxu0 0.0
        %418 = vmatpush1.xpose.msra.mxu0 0.0
        %419 = vmatprep.subr.mxu0 0.0
        %420 = vmatpush1.xpose.msra.mxu0 0.0
        %421 = vmatprep.subr.mxu0 0.0
        %422 = vmatpush1.xpose.msra.mxu0 0.0
        %423 = vmatprep.subr.mxu0 0.0
        %424 = vmatpush1.xpose.msra.mxu0 0.0
        %425 = vmatprep.subr.mxu0 0.0
        %426 = vmatpush1.xpose.msra.mxu0 0.0
        %427 = vmatprep.subr.mxu0 0.0
        %428 = vmatpush1.xpose.msra.mxu0 0.0
        %429 = vmatprep.subr.mxu0 0.0
        %430 = vmatpush1.xpose.msra.mxu0 0.0
        %431 = vmatprep.subr.mxu0 0.0
        %432 = vmatpush1.xpose.msra.mxu0 0.0
        %433 = vmatprep.subr.mxu0 0.0
        %434 = vmatpush1.xpose.msra.mxu0 0.0
        %435 = vmatprep.subr.mxu0 0.0
        %436 = vmatpush1.xpose.msra.mxu0 0.0
        %437 = vmatprep.subr.mxu0 0.0
        %438 = vmatpush1.xpose.msra.mxu0 0.0
        %439 = vmatprep.subr.mxu0 0.0
        %440 = vmatpush1.xpose.msra.mxu0 0.0
        %441 = vmatprep.subr.mxu0 0.0
        %442 = vmatpush1.xpose.msra.mxu0 0.0
        %443 = vmatprep.subr.mxu0 0.0
        %444 = vmatpush1.xpose.msra.mxu0 0.0
        %445 = vmatprep.subr.mxu0 0.0
        %446 = vmatpush1.xpose.msra.mxu0 0.0
        %447 = vmatprep.subr.mxu0 0.0
        %448 = vmatpush1.xpose.msra.mxu0 0.0
        %449 = vmatprep.subr.mxu0 0.0
        %450 = vmatpush1.xpose.msra.mxu0 0.0
        %451 = vmatprep.subr.mxu0 0.0
        %452 = vmatpush1.xpose.msra.mxu0 0.0
        %453 = vmatprep.subr.mxu0 0.0
        %454 = vmatpush1.xpose.msra.mxu0 0.0
        %455 = vmatprep.subr.mxu0 0.0
        %456 = vmatpush1.xpose.msra.mxu0 0.0
        %457 = vmatprep.subr.mxu0 0.0
        %458 = vmatpush1.xpose.msra.mxu0 0.0
        %459 = vmatprep.subr.mxu0 0.0
        %460 = vmatpush1.xpose.msra.mxu0 0.0
        %461 = vmatprep.subr.mxu0 0.0
        %462 = vmatpush1.xpose.msra.mxu0 0.0
        %463 = vmatprep.subr.mxu0 0.0
        %464 = vmatpush1.xpose.msra.mxu0 0.0
        %465 = vmatprep.subr.mxu0 0.0
        %466 = vmatpush1.xpose.msra.mxu0 0.0
        %467 = vmatprep.mubr.f32.mxu0 0.0
        %468 = vmatmul.mubr.f32.gmra.mrb[0].mxu0 %v392
        %v469 = vpop.f32.mrb[0].mxu0
        %v470 = vadd.f32 0.0, %v469
        %v471 = vpop.f32.mrb[0].mxu0
        %472 = vmatprep.mubr.f32.mxu0 0.0
        %473 = vmatmul.mubr.f32.gmra.mrb[0].mxu0 %v395
        %v474 = vpop.f32.mrb[0].mxu0
        %v475 = vadd.f32 0.0, %v474
        %v476 = vpop.f32.mrb[0].mxu0
        %477 = vdwg.mxu0
        %v479 = vsel %vm390, %v368, 0
        %v482 = vsel %vm390, %v369, 0
        %v485 = vsel %vm390, %v376, 0
        %v488 = vsel %vm390, %v377, 0
        %490 = vmatprep.subr.mxu0 0.0
        %491 = vmatpush1.xpose.msra.mxu0 %v485
        %492 = vmatprep.subr.mxu0 0.0
        %493 = vmatpush1.xpose.msra.mxu0 %v488
        %494 = vmatprep.subr.mxu0 0.0
        %495 = vmatpush1.xpose.msra.mxu0 0.0
        %496 = vmatprep.subr.mxu0 0.0
        %497 = vmatpush1.xpose.msra.mxu0 0.0
        %498 = vmatprep.subr.mxu0 0.0
        %499 = vmatpush1.xpose.msra.mxu0 0.0
        %500 = vmatprep.subr.mxu0 0.0
        %501 = vmatpush1.xpose.msra.mxu0 0.0
        %502 = vmatprep.subr.mxu0 0.0
        %503 = vmatpush1.xpose.msra.mxu0 0.0
        %504 = vmatprep.subr.mxu0 0.0
        %505 = vmatpush1.xpose.msra.mxu0 0.0
        %506 = vmatprep.subr.mxu0 0.0
        %507 = vmatpush1.xpose.msra.mxu0 0.0
        %508 = vmatprep.subr.mxu0 0.0
        %509 = vmatpush1.xpose.msra.mxu0 0.0
        %510 = vmatprep.subr.mxu0 0.0
        %511 = vmatpush1.xpose.msra.mxu0 0.0
        %512 = vmatprep.subr.mxu0 0.0
        %513 = vmatpush1.xpose.msra.mxu0 0.0
        %514 = vmatprep.subr.mxu0 0.0
        %515 = vmatpush1.xpose.msra.mxu0 0.0
        %516 = vmatprep.subr.mxu0 0.0
        %517 = vmatpush1.xpose.msra.mxu0 0.0
        %518 = vmatprep.subr.mxu0 0.0
        %519 = vmatpush1.xpose.msra.mxu0 0.0
        %520 = vmatprep.subr.mxu0 0.0
        %521 = vmatpush1.xpose.msra.mxu0 0.0
        %522 = vmatprep.subr.mxu0 0.0
        %523 = vmatpush1.xpose.msra.mxu0 0.0
        %524 = vmatprep.subr.mxu0 0.0
        %525 = vmatpush1.xpose.msra.mxu0 0.0
        %526 = vmatprep.subr.mxu0 0.0
        %527 = vmatpush1.xpose.msra.mxu0 0.0
        %528 = vmatprep.subr.mxu0 0.0
        %529 = vmatpush1.xpose.msra.mxu0 0.0
        %530 = vmatprep.subr.mxu0 0.0
        %531 = vmatpush1.xpose.msra.mxu0 0.0
        %532 = vmatprep.subr.mxu0 0.0
        %533 = vmatpush1.xpose.msra.mxu0 0.0
        %534 = vmatprep.subr.mxu0 0.0
        %535 = vmatpush1.xpose.msra.mxu0 0.0
        %536 = vmatprep.subr.mxu0 0.0
        %537 = vmatpush1.xpose.msra.mxu0 0.0
        %538 = vmatprep.subr.mxu0 0.0
        %539 = vmatpush1.xpose.msra.mxu0 0.0
        %540 = vmatprep.subr.mxu0 0.0
        %541 = vmatpush1.xpose.msra.mxu0 0.0
        %542 = vmatprep.subr.mxu0 0.0
        %543 = vmatpush1.xpose.msra.mxu0 0.0
        %544 = vmatprep.subr.mxu0 0.0
        %545 = vmatpush1.xpose.msra.mxu0 0.0
        %546 = vmatprep.subr.mxu0 0.0
        %547 = vmatpush1.xpose.msra.mxu0 0.0
        %548 = vmatprep.subr.mxu0 0.0
        %549 = vmatpush1.xpose.msra.mxu0 0.0
        %550 = vmatprep.subr.mxu0 0.0
        %551 = vmatpush1.xpose.msra.mxu0 0.0
        %552 = vmatprep.subr.mxu0 0.0
        %553 = vmatpush1.xpose.msra.mxu0 0.0
        %554 = vmatprep.mubr.f32.mxu0 0.0
        %555 = vmatmul.mubr.f32.gmra.mrb[0].mxu0 %v479
        %v556 = vpop.f32.mrb[0].mxu0
        %v557 = vadd.f32 0.0, %v556
        %v558 = vpop.f32.mrb[0].mxu0
        %559 = vmatprep.mubr.f32.mxu0 0.0
        %560 = vmatmul.mubr.f32.gmra.mrb[0].mxu0 %v482
        %v561 = vpop.f32.mrb[0].mxu0
        %v562 = vadd.f32 0.0, %v561
        %v563 = vpop.f32.mrb[0].mxu0
        %564 = vdwg.mxu0
        %v566 = vsel %vm390, %v370, 0
        %v569 = vsel %vm390, %v371, 0
        %v572 = vsel %vm390, %v378, 0
        %v575 = vsel %vm390, %v379, 0
        %577 = vmatprep.subr.mxu0 0.0
        %578 = vmatpush1.xpose.msra.mxu0 %v572
        %579 = vmatprep.subr.mxu0 0.0
        %580 = vmatpush1.xpose.msra.mxu0 %v575
        %581 = vmatprep.subr.mxu0 0.0
        %582 = vmatpush1.xpose.msra.mxu0 0.0
        %583 = vmatprep.subr.mxu0 0.0
        %584 = vmatpush1.xpose.msra.mxu0 0.0
        %585 = vmatprep.subr.mxu0 0.0
        %586 = vmatpush1.xpose.msra.mxu0 0.0
        %587 = vmatprep.subr.mxu0 0.0
        %588 = vmatpush1.xpose.msra.mxu0 0.0
        %589 = vmatprep.subr.mxu0 0.0
        %590 = vmatpush1.xpose.msra.mxu0 0.0
        %591 = vmatprep.subr.mxu0 0.0
        %592 = vmatpush1.xpose.msra.mxu0 0.0
        %593 = vmatprep.subr.mxu0 0.0
        %594 = vmatpush1.xpose.msra.mxu0 0.0
        %595 = vmatprep.subr.mxu0 0.0
        %596 = vmatpush1.xpose.msra.mxu0 0.0
        %597 = vmatprep.subr.mxu0 0.0
        %598 = vmatpush1.xpose.msra.mxu0 0.0
        %599 = vmatprep.subr.mxu0 0.0
        %600 = vmatpush1.xpose.msra.mxu0 0.0
        %601 = vmatprep.subr.mxu0 0.0
        %602 = vmatpush1.xpose.msra.mxu0 0.0
        %603 = vmatprep.subr.mxu0 0.0
        %604 = vmatpush1.xpose.msra.mxu0 0.0
        %605 = vmatprep.subr.mxu0 0.0
        %606 = vmatpush1.xpose.msra.mxu0 0.0
        %607 = vmatprep.subr.mxu0 0.0
        %608 = vmatpush1.xpose.msra.mxu0 0.0
        %609 = vmatprep.subr.mxu0 0.0
        %610 = vmatpush1.xpose.msra.mxu0 0.0
        %611 = vmatprep.subr.mxu0 0.0
        %612 = vmatpush1.xpose.msra.mxu0 0.0
        %613 = vmatprep.subr.mxu0 0.0
        %614 = vmatpush1.xpose.msra.mxu0 0.0
        %615 = vmatprep.subr.mxu0 0.0
        %616 = vmatpush1.xpose.msra.mxu0 0.0
        %617 = vmatprep.subr.mxu0 0.0
        %618 = vmatpush1.xpose.msra.mxu0 0.0
        %619 = vmatprep.subr.mxu0 0.0
        %620 = vmatpush1.xpose.msra.mxu0 0.0
        %621 = vmatprep.subr.mxu0 0.0
        %622 = vmatpush1.xpose.msra.mxu0 0.0
        %623 = vmatprep.subr.mxu0 0.0
        %624 = vmatpush1.xpose.msra.mxu0 0.0
        %625 = vmatprep.subr.mxu0 0.0
        %626 = vmatpush1.xpose.msra.mxu0 0.0
        %627 = vmatprep.subr.mxu0 0.0
        %628 = vmatpush1.xpose.msra.mxu0 0.0
        %629 = vmatprep.subr.mxu0 0.0
        %630 = vmatpush1.xpose.msra.mxu0 0.0
        %631 = vmatprep.subr.mxu0 0.0
        %632 = vmatpush1.xpose.msra.mxu0 0.0
        %633 = vmatprep.subr.mxu0 0.0
        %634 = vmatpush1.xpose.msra.mxu0 0.0
        %635 = vmatprep.subr.mxu0 0.0
        %636 = vmatpush1.xpose.msra.mxu0 0.0
        %637 = vmatprep.subr.mxu0 0.0
        %638 = vmatpush1.xpose.msra.mxu0 0.0
        %639 = vmatprep.subr.mxu0 0.0
        %640 = vmatpush1.xpose.msra.mxu0 0.0
        %641 = vmatprep.mubr.f32.mxu0 0.0
        %642 = vmatmul.mubr.f32.gmra.mrb[0].mxu0 %v566
        %v643 = vpop.f32.mrb[0].mxu0
        %v644 = vadd.f32 0.0, %v643
        %v645 = vpop.f32.mrb[0].mxu0
        %646 = vmatprep.mubr.f32.mxu0 0.0
        %647 = vmatmul.mubr.f32.gmra.mrb[0].mxu0 %v569
        %v648 = vpop.f32.mrb[0].mxu0
        %v649 = vadd.f32 0.0, %v648
        %v650 = vpop.f32.mrb[0].mxu0
        %651 = vdwg.mxu0
        %v653 = vsel %vm390, %v372, 0
        %v656 = vsel %vm390, %v373, 0
        %v659 = vsel %vm390, %v380, 0
        %v662 = vsel %vm390, %v381, 0
        %664 = vmatprep.subr.mxu0 0.0
        %665 = vmatpush1.xpose.msra.mxu0 %v659
        %666 = vmatprep.subr.mxu0 0.0
        %667 = vmatpush1.xpose.msra.mxu0 %v662
        %668 = vmatprep.subr.mxu0 0.0
        %669 = vmatpush1.xpose.msra.mxu0 0.0
        %670 = vmatprep.subr.mxu0 0.0
        %671 = vmatpush1.xpose.msra.mxu0 0.0
        %672 = vmatprep.subr.mxu0 0.0
        %673 = vmatpush1.xpose.msra.mxu0 0.0
        %674 = vmatprep.subr.mxu0 0.0
        %675 = vmatpush1.xpose.msra.mxu0 0.0
        %676 = vmatprep.subr.mxu0 0.0
        %677 = vmatpush1.xpose.msra.mxu0 0.0
        %678 = vmatprep.subr.mxu0 0.0
        %679 = vmatpush1.xpose.msra.mxu0 0.0
        %680 = vmatprep.subr.mxu0 0.0
        %681 = vmatpush1.xpose.msra.mxu0 0.0
        %682 = vmatprep.subr.mxu0 0.0
        %683 = vmatpush1.xpose.msra.mxu0 0.0
        %684 = vmatprep.subr.mxu0 0.0
        %685 = vmatpush1.xpose.msra.mxu0 0.0
        %686 = vmatprep.subr.mxu0 0.0
        %687 = vmatpush1.xpose.msra.mxu0 0.0
        %688 = vmatprep.subr.mxu0 0.0
        %689 = vmatpush1.xpose.msra.mxu0 0.0
        %690 = vmatprep.subr.mxu0 0.0
        %691 = vmatpush1.xpose.msra.mxu0 0.0
        %692 = vmatprep.subr.mxu0 0.0
        %693 = vmatpush1.xpose.msra.mxu0 0.0
        %694 = vmatprep.subr.mxu0 0.0
        %695 = vmatpush1.xpose.msra.mxu0 0.0
        %696 = vmatprep.subr.mxu0 0.0
        %697 = vmatpush1.xpose.msra.mxu0 0.0
        %698 = vmatprep.subr.mxu0 0.0
        %699 = vmatpush1.xpose.msra.mxu0 0.0
        %700 = vmatprep.subr.mxu0 0.0
        %701 = vmatpush1.xpose.msra.mxu0 0.0
        %702 = vmatprep.subr.mxu0 0.0
        %703 = vmatpush1.xpose.msra.mxu0 0.0
        %704 = vmatprep.subr.mxu0 0.0
        %705 = vmatpush1.xpose.msra.mxu0 0.0
        %706 = vmatprep.subr.mxu0 0.0
        %707 = vmatpush1.xpose.msra.mxu0 0.0
        %708 = vmatprep.subr.mxu0 0.0
        %709 = vmatpush1.xpose.msra.mxu0 0.0
        %710 = vmatprep.subr.mxu0 0.0
        %711 = vmatpush1.xpose.msra.mxu0 0.0
        %712 = vmatprep.subr.mxu0 0.0
        %713 = vmatpush1.xpose.msra.mxu0 0.0
        %714 = vmatprep.subr.mxu0 0.0
        %715 = vmatpush1.xpose.msra.mxu0 0.0
        %716 = vmatprep.subr.mxu0 0.0
        %717 = vmatpush1.xpose.msra.mxu0 0.0
        %718 = vmatprep.subr.mxu0 0.0
        %719 = vmatpush1.xpose.msra.mxu0 0.0
        %720 = vmatprep.subr.mxu0 0.0
        %721 = vmatpush1.xpose.msra.mxu0 0.0
        %722 = vmatprep.subr.mxu0 0.0
        %723 = vmatpush1.xpose.msra.mxu0 0.0
        %724 = vmatprep.subr.mxu0 0.0
        %725 = vmatpush1.xpose.msra.mxu0 0.0
        %726 = vmatprep.subr.mxu0 0.0
        %727 = vmatpush1.xpose.msra.mxu0 0.0
        %728 = vmatprep.mubr.f32.mxu0 0.0
        %729 = vmatmul.mubr.f32.gmra.mrb[0].mxu0 %v653
        %v730 = vpop.f32.mrb[0].mxu0
        %v731 = vadd.f32 0.0, %v730
        %v732 = vpop.f32.mrb[0].mxu0
        %733 = vmatprep.mubr.f32.mxu0 0.0
        %734 = vmatmul.mubr.f32.gmra.mrb[0].mxu0 %v656
        %v735 = vpop.f32.mrb[0].mxu0
        %v736 = vadd.f32 0.0, %v735
        %v737 = vpop.f32.mrb[0].mxu0
        %738 = vdwg.mxu0
        %vm739 = vcmask 130048
        %v740 = vsel %vm739, %v470, -inf
        %741 = vmax.xlane.f32.xlu0 %v740
        %v742 = vpop.xlane.xlu0 %741
        %v743 = vsel %vm739, %v475, -inf
        %744 = vmax.xlane.f32.xlu0 %v743
        %v745 = vpop.xlane.xlu0 %744
        %v746 = vsel %vm739, %v557, -inf
        %747 = vmax.xlane.f32.xlu0 %v746
        %v748 = vpop.xlane.xlu0 %747
        %v749 = vsel %vm739, %v562, -inf
        %750 = vmax.xlane.f32.xlu0 %v749
        %v751 = vpop.xlane.xlu0 %750
        %v752 = vsel %vm739, %v644, -inf
        %753 = vmax.xlane.f32.xlu0 %v752
        %v754 = vpop.xlane.xlu0 %753
        %v755 = vsel %vm739, %v649, -inf
        %756 = vmax.xlane.f32.xlu0 %v755
        %v757 = vpop.xlane.xlu0 %756
        %v758 = vsel %vm739, %v731, -inf
        %759 = vmax.xlane.f32.xlu0 %v758
        %v760 = vpop.xlane.xlu0 %759
        %v761 = vsel %vm739, %v736, -inf
        %762 = vmax.xlane.f32.xlu0 %v761
        %v763 = vpop.xlane.xlu0 %762
        %v764 = vsub.f32 %v470, %v742
        %v765 = vsub.f32 %v475, %v745
        %v766 = vsub.f32 %v557, %v748
        %v767 = vsub.f32 %v562, %v751
        %v768 = vsub.f32 %v644, %v754
        %v769 = vsub.f32 %v649, %v757
        %v770 = vsub.f32 %v731, %v760
        %v771 = vsub.f32 %v736, %v763
        %v772 = vmul.f32 %v764, 1.442695
        %v773 = vpow.pop %v772
        %v774 = vmul.f32 %v765, 1.442695
        %v775 = vpow.pop %v774
        %v776 = vmul.f32 %v766, 1.442695
        %v777 = vpow.pop %v776
        %v778 = vmul.f32 %v767, 1.442695
        %v779 = vpow.pop %v778
        %v780 = vmul.f32 %v768, 1.442695
        %v781 = vpow.pop %v780
        %v782 = vmul.f32 %v769, 1.442695
        %v783 = vpow.pop %v782
        %v784 = vmul.f32 %v770, 1.442695
        %v785 = vpow.pop %v784
        %v786 = vmul.f32 %v771, 1.442695
        %v787 = vpow.pop %v786
        %v788 = vsel %vm739, %v773, 0.0
        %789 = vadd.xlane.f32.xlu0 %v788
        %v790 = vpop.xlane.xlu0 %789
        %v791 = vsel %vm739, %v775, 0.0
        %792 = vadd.xlane.f32.xlu0 %v791
        %v793 = vpop.xlane.xlu0 %792
        %v794 = vsel %vm739, %v777, 0.0
        %795 = vadd.xlane.f32.xlu0 %v794
        %v796 = vpop.xlane.xlu0 %795
        %v797 = vsel %vm739, %v779, 0.0
        %798 = vadd.xlane.f32.xlu0 %v797
        %v799 = vpop.xlane.xlu0 %798
        %v800 = vsel %vm739, %v781, 0.0
        %801 = vadd.xlane.f32.xlu0 %v800
        %v802 = vpop.xlane.xlu0 %801
        %v803 = vsel %vm739, %v783, 0.0
        %804 = vadd.xlane.f32.xlu0 %v803
        %v805 = vpop.xlane.xlu0 %804
        %v806 = vsel %vm739, %v785, 0.0
        %807 = vadd.xlane.f32.xlu0 %v806
        %v808 = vpop.xlane.xlu0 %807
        %v809 = vsel %vm739, %v787, 0.0
        %810 = vadd.xlane.f32.xlu0 %v809
        %v811 = vpop.xlane.xlu0 %810
        %v812 = vrcp.pop %v790
        %v813 = vrcp.pop %v793
        %v814 = vrcp.pop %v796
        %v815 = vrcp.pop %v799
        %v816 = vrcp.pop %v802
        %v817 = vrcp.pop %v805
        %v818 = vrcp.pop %v808
        %v819 = vrcp.pop %v811
        %v820 = vmul.f32 %v773, %v812
        %v821 = vmul.f32 %v775, %v813
        %v822 = vmul.f32 %v777, %v814
        %v823 = vmul.f32 %v779, %v815
        %v824 = vmul.f32 %v781, %v816
        %v825 = vmul.f32 %v783, %v817
        %v826 = vmul.f32 %v785, %v818
        %v827 = vmul.f32 %v787, %v819
        %828 = vst.msk [vmem:[%s342] sm:$0xff] %vm739, %v820
        %829 = vst.msk [vmem:[%s342 + $0x8] sm:$0xff] %vm739, %v821
        %830 = vst.msk [vmem:[%s342 + $0x10] sm:$0xff] %vm739, %v822
        %831 = vst.msk [vmem:[%s342 + $0x18] sm:$0xff] %vm739, %v823
        %832 = vst.msk [vmem:[%s342 + $0x20] sm:$0xff] %vm739, %v824
        %833 = vst.msk [vmem:[%s342 + $0x28] sm:$0xff] %vm739, %v825
        %834 = vst.msk [vmem:[%s342 + $0x30] sm:$0xff] %vm739, %v826
        %835 = vst.msk [vmem:[%s342 + $0x38] sm:$0xff] %vm739, %v827
        %v837 = vsel %vm739, %v820, 0
        %v840 = vsel %vm739, %v821, 0
        %842 = vmatprep.subr.mxu0 0.0
        %843 = vmatpush1.msra.mxu0 %v382
        %844 = vmatprep.subr.mxu0 0.0
        %845 = vmatpush1.msra.mxu0 %v383
        %846 = vmatprep.subr.mxu0 0.0
        %847 = vmatpush1.msra.mxu0 0.0
        %848 = vmatprep.subr.mxu0 0.0
        %849 = vmatpush1.msra.mxu0 0.0
        %850 = vmatprep.subr.mxu0 0.0
        %851 = vmatpush1.msra.mxu0 0.0
        %852 = vmatprep.subr.mxu0 0.0
        %853 = vmatpush1.msra.mxu0 0.0
        %854 = vmatprep.subr.mxu0 0.0
        %855 = vmatpush1.msra.mxu0 0.0
        %856 = vmatprep.subr.mxu0 0.0
        %857 = vmatpush1.msra.mxu0 0.0
        %858 = vmatprep.subr.mxu0 0.0
        %859 = vmatpush1.msra.mxu0 0.0
        %860 = vmatprep.subr.mxu0 0.0
        %861 = vmatpush1.msra.mxu0 0.0
        %862 = vmatprep.subr.mxu0 0.0
        %863 = vmatpush1.msra.mxu0 0.0
        %864 = vmatprep.subr.mxu0 0.0
        %865 = vmatpush1.msra.mxu0 0.0
        %866 = vmatprep.subr.mxu0 0.0
        %867 = vmatpush1.msra.mxu0 0.0
        %868 = vmatprep.subr.mxu0 0.0
        %869 = vmatpush1.msra.mxu0 0.0
        %870 = vmatprep.subr.mxu0 0.0
        %871 = vmatpush1.msra.mxu0 0.0
        %872 = vmatprep.subr.mxu0 0.0
        %873 = vmatpush1.msra.mxu0 0.0
        %874 = vmatprep.subr.mxu0 0.0
        %875 = vmatpush1.msra.mxu0 0.0
        %876 = vmatprep.subr.mxu0 0.0
        %877 = vmatpush1.msra.mxu0 0.0
        %878 = vmatprep.subr.mxu0 0.0
        %879 = vmatpush1.msra.mxu0 0.0
        %880 = vmatprep.subr.mxu0 0.0
        %881 = vmatpush1.msra.mxu0 0.0
        %882 = vmatprep.subr.mxu0 0.0
        %883 = vmatpush1.msra.mxu0 0.0
        %884 = vmatprep.subr.mxu0 0.0
        %885 = vmatpush1.msra.mxu0 0.0
        %886 = vmatprep.subr.mxu0 0.0
        %887 = vmatpush1.msra.mxu0 0.0
        %888 = vmatprep.subr.mxu0 0.0
        %889 = vmatpush1.msra.mxu0 0.0
        %890 = vmatprep.subr.mxu0 0.0
        %891 = vmatpush1.msra.mxu0 0.0
        %892 = vmatprep.subr.mxu0 0.0
        %893 = vmatpush1.msra.mxu0 0.0
        %894 = vmatprep.subr.mxu0 0.0
        %895 = vmatpush1.msra.mxu0 0.0
        %896 = vmatprep.subr.mxu0 0.0
        %897 = vmatpush1.msra.mxu0 0.0
        %898 = vmatprep.subr.mxu0 0.0
        %899 = vmatpush1.msra.mxu0 0.0
        %900 = vmatprep.subr.mxu0 0.0
        %901 = vmatpush1.msra.mxu0 0.0
        %902 = vmatprep.subr.mxu0 0.0
        %903 = vmatpush1.msra.mxu0 0.0
        %904 = vmatprep.subr.mxu0 0.0
        %905 = vmatpush1.msra.mxu0 0.0
        %906 = vmatprep.mubr.f32.mxu0 0.0
        %907 = vmatmul.mubr.f32.gmra.mrb[0].mxu0 %v837
        %v908 = vpop.f32.mrb[0].mxu0
        %v909 = vadd.f32 0.0, %v908
        %v910 = vpop.f32.mrb[0].mxu0
        %911 = vmatprep.mubr.f32.mxu0 0.0
        %912 = vmatmul.mubr.f32.gmra.mrb[0].mxu0 %v840
        %v913 = vpop.f32.mrb[0].mxu0
        %v914 = vadd.f32 0.0, %v913
        %v915 = vpop.f32.mrb[0].mxu0
        %916 = vdwg.mxu0
        %v918 = vsel %vm739, %v822, 0
        %v921 = vsel %vm739, %v823, 0
        %923 = vmatprep.subr.mxu0 0.0
        %924 = vmatpush1.msra.mxu0 %v384
        %925 = vmatprep.subr.mxu0 0.0
        %926 = vmatpush1.msra.mxu0 %v385
        %927 = vmatprep.subr.mxu0 0.0
        %928 = vmatpush1.msra.mxu0 0.0
        %929 = vmatprep.subr.mxu0 0.0
        %930 = vmatpush1.msra.mxu0 0.0
        %931 = vmatprep.subr.mxu0 0.0
        %932 = vmatpush1.msra.mxu0 0.0
        %933 = vmatprep.subr.mxu0 0.0
        %934 = vmatpush1.msra.mxu0 0.0
        %935 = vmatprep.subr.mxu0 0.0
        %936 = vmatpush1.msra.mxu0 0.0
        %937 = vmatprep.subr.mxu0 0.0
        %938 = vmatpush1.msra.mxu0 0.0
        %939 = vmatprep.subr.mxu0 0.0
        %940 = vmatpush1.msra.mxu0 0.0
        %941 = vmatprep.subr.mxu0 0.0
        %942 = vmatpush1.msra.mxu0 0.0
        %943 = vmatprep.subr.mxu0 0.0
        %944 = vmatpush1.msra.mxu0 0.0
        %945 = vmatprep.subr.mxu0 0.0
        %946 = vmatpush1.msra.mxu0 0.0
        %947 = vmatprep.subr.mxu0 0.0
        %948 = vmatpush1.msra.mxu0 0.0
        %949 = vmatprep.subr.mxu0 0.0
        %950 = vmatpush1.msra.mxu0 0.0
        %951 = vmatprep.subr.mxu0 0.0
        %952 = vmatpush1.msra.mxu0 0.0
        %953 = vmatprep.subr.mxu0 0.0
        %954 = vmatpush1.msra.mxu0 0.0
        %955 = vmatprep.subr.mxu0 0.0
        %956 = vmatpush1.msra.mxu0 0.0
        %957 = vmatprep.subr.mxu0 0.0
        %958 = vmatpush1.msra.mxu0 0.0
        %959 = vmatprep.subr.mxu0 0.0
        %960 = vmatpush1.msra.mxu0 0.0
        %961 = vmatprep.subr.mxu0 0.0
        %962 = vmatpush1.msra.mxu0 0.0
        %963 = vmatprep.subr.mxu0 0.0
        %964 = vmatpush1.msra.mxu0 0.0
        %965 = vmatprep.subr.mxu0 0.0
        %966 = vmatpush1.msra.mxu0 0.0
        %967 = vmatprep.subr.mxu0 0.0
        %968 = vmatpush1.msra.mxu0 0.0
        %969 = vmatprep.subr.mxu0 0.0
        %970 = vmatpush1.msra.mxu0 0.0
        %971 = vmatprep.subr.mxu0 0.0
        %972 = vmatpush1.msra.mxu0 0.0
        %973 = vmatprep.subr.mxu0 0.0
        %974 = vmatpush1.msra.mxu0 0.0
        %975 = vmatprep.subr.mxu0 0.0
        %976 = vmatpush1.msra.mxu0 0.0
        %977 = vmatprep.subr.mxu0 0.0
        %978 = vmatpush1.msra.mxu0 0.0
        %979 = vmatprep.subr.mxu0 0.0
        %980 = vmatpush1.msra.mxu0 0.0
        %981 = vmatprep.subr.mxu0 0.0
        %982 = vmatpush1.msra.mxu0 0.0
        %983 = vmatprep.subr.mxu0 0.0
        %984 = vmatpush1.msra.mxu0 0.0
        %985 = vmatprep.subr.mxu0 0.0
        %986 = vmatpush1.msra.mxu0 0.0
        %987 = vmatprep.mubr.f32.mxu0 0.0
        %988 = vmatmul.mubr.f32.gmra.mrb[0].mxu0 %v918
        %v989 = vpop.f32.mrb[0].mxu0
        %v990 = vadd.f32 0.0, %v989
        %v991 = vpop.f32.mrb[0].mxu0
        %992 = vmatprep.mubr.f32.mxu0 0.0
        %993 = vmatmul.mubr.f32.gmra.mrb[0].mxu0 %v921
        %v994 = vpop.f32.mrb[0].mxu0
        %v995 = vadd.f32 0.0, %v994
        %v996 = vpop.f32.mrb[0].mxu0
        %997 = vdwg.mxu0
        %v999 = vsel %vm739, %v824, 0
        %v1002 = vsel %vm739, %v825, 0
        %1004 = vmatprep.subr.mxu0 0.0
        %1005 = vmatpush1.msra.mxu0 %v386
        %1006 = vmatprep.subr.mxu0 0.0
        %1007 = vmatpush1.msra.mxu0 %v387
        %1008 = vmatprep.subr.mxu0 0.0
        %1009 = vmatpush1.msra.mxu0 0.0
        %1010 = vmatprep.subr.mxu0 0.0
        %1011 = vmatpush1.msra.mxu0 0.0
        %1012 = vmatprep.subr.mxu0 0.0
        %1013 = vmatpush1.msra.mxu0 0.0
        %1014 = vmatprep.subr.mxu0 0.0
        %1015 = vmatpush1.msra.mxu0 0.0
        %1016 = vmatprep.subr.mxu0 0.0
        %1017 = vmatpush1.msra.mxu0 0.0
        %1018 = vmatprep.subr.mxu0 0.0
        %1019 = vmatpush1.msra.mxu0 0.0
        %1020 = vmatprep.subr.mxu0 0.0
        %1021 = vmatpush1.msra.mxu0 0.0
        %1022 = vmatprep.subr.mxu0 0.0
        %1023 = vmatpush1.msra.mxu0 0.0
        %1024 = vmatprep.subr.mxu0 0.0
        %1025 = vmatpush1.msra.mxu0 0.0
        %1026 = vmatprep.subr.mxu0 0.0
        %1027 = vmatpush1.msra.mxu0 0.0
        %1028 = vmatprep.subr.mxu0 0.0
        %1029 = vmatpush1.msra.mxu0 0.0
        %1030 = vmatprep.subr.mxu0 0.0
        %1031 = vmatpush1.msra.mxu0 0.0
        %1032 = vmatprep.subr.mxu0 0.0
        %1033 = vmatpush1.msra.mxu0 0.0
        %1034 = vmatprep.subr.mxu0 0.0
        %1035 = vmatpush1.msra.mxu0 0.0
        %1036 = vmatprep.subr.mxu0 0.0
        %1037 = vmatpush1.msra.mxu0 0.0
        %1038 = vmatprep.subr.mxu0 0.0
        %1039 = vmatpush1.msra.mxu0 0.0
        %1040 = vmatprep.subr.mxu0 0.0
        %1041 = vmatpush1.msra.mxu0 0.0
        %1042 = vmatprep.subr.mxu0 0.0
        %1043 = vmatpush1.msra.mxu0 0.0
        %1044 = vmatprep.subr.mxu0 0.0
        %1045 = vmatpush1.msra.mxu0 0.0
        %1046 = vmatprep.subr.mxu0 0.0
        %1047 = vmatpush1.msra.mxu0 0.0
        %1048 = vmatprep.subr.mxu0 0.0
        %1049 = vmatpush1.msra.mxu0 0.0
        %1050 = vmatprep.subr.mxu0 0.0
        %1051 = vmatpush1.msra.mxu0 0.0
        %1052 = vmatprep.subr.mxu0 0.0
        %1053 = vmatpush1.msra.mxu0 0.0
        %1054 = vmatprep.subr.mxu0 0.0
        %1055 = vmatpush1.msra.mxu0 0.0
        %1056 = vmatprep.subr.mxu0 0.0
        %1057 = vmatpush1.msra.mxu0 0.0
        %1058 = vmatprep.subr.mxu0 0.0
        %1059 = vmatpush1.msra.mxu0 0.0
        %1060 = vmatprep.subr.mxu0 0.0
        %1061 = vmatpush1.msra.mxu0 0.0
        %1062 = vmatprep.subr.mxu0 0.0
        %1063 = vmatpush1.msra.mxu0 0.0
        %1064 = vmatprep.subr.mxu0 0.0
        %1065 = vmatpush1.msra.mxu0 0.0
        %1066 = vmatprep.subr.mxu0 0.0
        %1067 = vmatpush1.msra.mxu0 0.0
        %1068 = vmatprep.mubr.f32.mxu0 0.0
        %1069 = vmatmul.mubr.f32.gmra.mrb[0].mxu0 %v999
        %v1070 = vpop.f32.mrb[0].mxu0
        %v1071 = vadd.f32 0.0, %v1070
        %v1072 = vpop.f32.mrb[0].mxu0
        %1073 = vmatprep.mubr.f32.mxu0 0.0
        %1074 = vmatmul.mubr.f32.gmra.mrb[0].mxu0 %v1002
        %v1075 = vpop.f32.mrb[0].mxu0
        %v1076 = vadd.f32 0.0, %v1075
        %v1077 = vpop.f32.mrb[0].mxu0
        %1078 = vdwg.mxu0
        %v1080 = vsel %vm739, %v826, 0
        %v1083 = vsel %vm739, %v827, 0
        %1085 = vmatprep.subr.mxu0 0.0
        %1086 = vmatpush1.msra.mxu0 %v388
        %1087 = vmatprep.subr.mxu0 0.0
        %1088 = vmatpush1.msra.mxu0 %v389
        %1089 = vmatprep.subr.mxu0 0.0
        %1090 = vmatpush1.msra.mxu0 0.0
        %1091 = vmatprep.subr.mxu0 0.0
        %1092 = vmatpush1.msra.mxu0 0.0
        %1093 = vmatprep.subr.mxu0 0.0
        %1094 = vmatpush1.msra.mxu0 0.0
        %1095 = vmatprep.subr.mxu0 0.0
        %1096 = vmatpush1.msra.mxu0 0.0
        %1097 = vmatprep.subr.mxu0 0.0
        %1098 = vmatpush1.msra.mxu0 0.0
        %1099 = vmatprep.subr.mxu0 0.0
        %1100 = vmatpush1.msra.mxu0 0.0
        %1101 = vmatprep.subr.mxu0 0.0
        %1102 = vmatpush1.msra.mxu0 0.0
        %1103 = vmatprep.subr.mxu0 0.0
        %1104 = vmatpush1.msra.mxu0 0.0
        %1105 = vmatprep.subr.mxu0 0.0
        %1106 = vmatpush1.msra.mxu0 0.0
        %1107 = vmatprep.subr.mxu0 0.0
        %1108 = vmatpush1.msra.mxu0 0.0
        %1109 = vmatprep.subr.mxu0 0.0
        %1110 = vmatpush1.msra.mxu0 0.0
        %1111 = vmatprep.subr.mxu0 0.0
        %1112 = vmatpush1.msra.mxu0 0.0
        %1113 = vmatprep.subr.mxu0 0.0
        %1114 = vmatpush1.msra.mxu0 0.0
        %1115 = vmatprep.subr.mxu0 0.0
        %1116 = vmatpush1.msra.mxu0 0.0
        %1117 = vmatprep.subr.mxu0 0.0
        %1118 = vmatpush1.msra.mxu0 0.0
        %1119 = vmatprep.subr.mxu0 0.0
        %1120 = vmatpush1.msra.mxu0 0.0
        %1121 = vmatprep.subr.mxu0 0.0
        %1122 = vmatpush1.msra.mxu0 0.0
        %1123 = vmatprep.subr.mxu0 0.0
        %1124 = vmatpush1.msra.mxu0 0.0
        %1125 = vmatprep.subr.mxu0 0.0
        %1126 = vmatpush1.msra.mxu0 0.0
        %1127 = vmatprep.subr.mxu0 0.0
        %1128 = vmatpush1.msra.mxu0 0.0
        %1129 = vmatprep.subr.mxu0 0.0
        %1130 = vmatpush1.msra.mxu0 0.0
        %1131 = vmatprep.subr.mxu0 0.0
        %1132 = vmatpush1.msra.mxu0 0.0
        %1133 = vmatprep.subr.mxu0 0.0
        %1134 = vmatpush1.msra.mxu0 0.0
        %1135 = vmatprep.subr.mxu0 0.0
        %1136 = vmatpush1.msra.mxu0 0.0
        %1137 = vmatprep.subr.mxu0 0.0
        %1138 = vmatpush1.msra.mxu0 0.0
        %1139 = vmatprep.subr.mxu0 0.0
        %1140 = vmatpush1.msra.mxu0 0.0
        %1141 = vmatprep.subr.mxu0 0.0
        %1142 = vmatpush1.msra.mxu0 0.0
        %1143 = vmatprep.subr.mxu0 0.0
        %1144 = vmatpush1.msra.mxu0 0.0
        %1145 = vmatprep.subr.mxu0 0.0
        %1146 = vmatpush1.msra.mxu0 0.0
        %1147 = vmatprep.subr.mxu0 0.0
        %1148 = vmatpush1.msra.mxu0 0.0
        %1149 = vmatprep.mubr.f32.mxu0 0.0
        %1150 = vmatmul.mubr.f32.gmra.mrb[0].mxu0 %v1080
        %v1151 = vpop.f32.mrb[0].mxu0
        %v1152 = vadd.f32 0.0, %v1151
        %v1153 = vpop.f32.mrb[0].mxu0
        %1154 = vmatprep.mubr.f32.mxu0 0.0
        %1155 = vmatmul.mubr.f32.gmra.mrb[0].mxu0 %v1083
        %v1156 = vpop.f32.mrb[0].mxu0
        %v1157 = vadd.f32 0.0, %v1156
        %v1158 = vpop.f32.mrb[0].mxu0
        %1159 = vdwg.mxu0
        %1160 = vst.msk [vmem:[%s349] sm:$0xff] %vm390, %v909
        %1161 = vst.msk [vmem:[%s349 + $0x8] sm:$0xff] %vm390, %v914
        %1162 = vst.msk [vmem:[%s349 + $0x10] sm:$0xff] %vm390, %v990
        %1163 = vst.msk [vmem:[%s349 + $0x18] sm:$0xff] %vm390, %v995
        %1164 = vst.msk [vmem:[%s349 + $0x20] sm:$0xff] %vm390, %v1071
        %1165 = vst.msk [vmem:[%s349 + $0x28] sm:$0xff] %vm390, %v1076
        %1166 = vst.msk [vmem:[%s349 + $0x30] sm:$0xff] %vm390, %v1152
        %1167 = vst.msk [vmem:[%s349 + $0x38] sm:$0xff] %vm390, %v1157
        %s1168 = sand.u32 %s145, 1
        %s1169 = scalar_lea.sflag [#allocation4], %s1168
        %s1170 = sand.u32 %s145, 1
        %s1171 = smul.addr %s1170, 64
        %s1172 = scalar_lea.vmem [#allocation8], %s1171
        %s1173 = sand.u32 %s175, 1
        %s1174 = scalar_lea.sflag [#allocation10], %s1173
        %s1175 = sand.u32 %s175, 1
        %s1176 = smul.addr %s1175, 64
        %s1177 = scalar_lea.vmem [#allocation9], %s1176
        // Predicated region
        $region45: #{tpu_custom_call.1} parent=31 // pred_check
          %p1178 = pneg %p155
        $region46: #{tpu_custom_call.1} parent=31 // pred_check_branch
          %1180 = sbr.rel (%p1178) target = $region48
        $region47: #{tpu_custom_call.1} parent=31 // pred_region
          %s1181 = smul.u32 4, %s34
          %s1182 = smul.u32 2, %s35
          %s1184 = ssub.s32 1024, 1024
          %1185 = vsyncadd %s1169, %s1184
          %s1186 = smul.addr %s1181, 2
          %s1187 = sadd.s32 %s1182, %s1186
          %s1188 = smul.addr %s33, 8
          %s1189 = sadd.s32 %s1187, %s1188
          %s1190 = smul.addr %s1189, 128
          %s1191 = scalar_lea.hbm %s3, %s1190
          %s1192 = sshll.u32 %s1172, 4
          %s1193 = int_to_ptr.vmem [resolvable:$true] %s1192
          %1198 = dma.vmem_to_hbm [thread:$0]  %s1193, 1024, %s1191, %s1169, 128, 128, 8
        $region48: #{tpu_custom_call.1} parent=31 // pred_fallthru
          _
        // Predicated region
        $region49: #{tpu_custom_call.1} parent=31 // pred_check
          %p1199 = pneg %p185
        $region50: #{tpu_custom_call.1} parent=31 // pred_check_branch
          %1201 = sbr.rel (%p1199) target = $region52
        $region51: #{tpu_custom_call.1} parent=31 // pred_region
          %s1202 = smul.u32 4, %s34
          %s1203 = smul.u32 2, %s35
          %s1205 = ssub.s32 1024, 1024
          %1206 = vsyncadd %s1174, %s1205
          %s1207 = smul.addr %s1202, 2
          %s1208 = sadd.s32 %s1203, %s1207
          %s1209 = smul.addr %s33, 8
          %s1210 = sadd.s32 %s1208, %s1209
          %s1211 = smul.addr %s1210, 128
          %s1212 = scalar_lea.hbm %s4, %s1211
          %s1213 = sshll.u32 %s1177, 4
          %s1214 = int_to_ptr.vmem [resolvable:$true] %s1213
          %1219 = dma.vmem_to_hbm [thread:$0]  %s1214, 1024, %s1212, %s1174, 128, 128, 8
        $region52: #{tpu_custom_call.1} parent=31 // pred_fallthru
          _
      $region32: #{tpu_custom_call.1} parent=5 // pred_fallthru
        _
      %p1220 = scmp.le.s32.totalorder 2, %s23
      // Predicated region
      $region53: #{tpu_custom_call.1} parent=5 // pred_check
        %p1221 = pneg %p1220
      $region54: #{tpu_custom_call.1} parent=5 // pred_check_branch
        %1223 = sbr.rel (%p1221) target = $region56
      $region55: #{tpu_custom_call.1} parent=5 // pred_region
        %s1224 = ssub.s32 %s23, 2
        // Predicated region
        $region57: #{tpu_custom_call.1} parent=55 // pred_check
          %p1225 = pneg %p161
        $region58: #{tpu_custom_call.1} parent=55 // pred_check_branch
          %1227 = sbr.rel (%p1225) target = $region60
        $region59: #{tpu_custom_call.1} parent=55 // pred_region
          %s1228 = sand.u32 %s146, 1
          %s1229 = scalar_lea.sflag [#allocation4], %s1228
          %s1230 = sand.u32 %s146, 1
          %s1231 = smul.addr %s1230, 64
          %s1232 = scalar_lea.vmem [#allocation8], %s1231
          %1233 = dma.done %s1229, 1024
        $region60: #{tpu_custom_call.1} parent=55 // pred_fallthru
          _
        // Predicated region
        $region61: #{tpu_custom_call.1} parent=55 // pred_check
          %p1234 = pneg %p191
        $region62: #{tpu_custom_call.1} parent=55 // pred_check_branch
          %1236 = sbr.rel (%p1234) target = $region64
        $region63: #{tpu_custom_call.1} parent=55 // pred_region
          %s1237 = sand.u32 %s176, 1
          %s1238 = scalar_lea.sflag [#allocation10], %s1237
          %s1239 = sand.u32 %s176, 1
          %s1240 = smul.addr %s1239, 64
          %s1241 = scalar_lea.vmem [#allocation9], %s1240
          %1242 = dma.done %s1238, 1024
        $region64: #{tpu_custom_call.1} parent=55 // pred_fallthru
          _
      $region56: #{tpu_custom_call.1} parent=5 // pred_fallthru
        _
    $region6: #{tpu_custom_call.1} parent=1 // loop_footer
      %s27 = sadd.s32 1, %s23
    $region7: #{tpu_custom_call.1} parent=1 // loop_footer_branch
      %22 = sbr.rel target = $region3
    $region8: #{tpu_custom_call.1} parent=1 // loop_exit
      _
    %1243 = vsyncpa [#allocation3], 1
    %s1244 = scalar_lea.sflag [#allocation3], 1
    %1245 = vsyncpa %s1244, 1
    %1246 = vsyncpa [#allocation6], 1
    %s1247 = scalar_lea.sflag [#allocation6], 1
    %1248 = vsyncpa %s1247, 1
    %1249 = vsyncpa [#allocation4], 1
    %s1250 = scalar_lea.sflag [#allocation4], 1
    %1251 = vsyncpa %s1250, 1
    %1252 = vsyncpa [#allocation10], 1
    %s1253 = scalar_lea.sflag [#allocation10], 1
    %1254 = vsyncpa %s1253, 1

</llo_original>
